<compile_context>
chip_gen: v6e
topology: v6e:2x2x1
jax: 0.10.0
libtpu: 0.0.40
codegen_flags: <defaults>
</compile_context>

<pallas_src>
import jax
import jax.numpy as jnp
from jax.experimental import pallas as pl
from jax.experimental.pallas import tpu as pltpu

F_PAD = 16           # padded feature width (covers both 2 and 10)
MAX_TILE_B = 1024    # batch tile on the lane axis; multiple of 128, tiny VMEM footprint


def mlp_kernel(x_ref, w_ref, b_ref, o_ref):
    """x_ref: (F_PAD, TILE_B); w_ref: (4, F_PAD, F_PAD); b_ref: (4, F_PAD, 1);
    o_ref: (2, TILE_B).
    Computes W4 @ relu(W3 @ relu(W2 @ relu(W1 @ x + b1) + b2) + b3) + b4."""
    h = x_ref[...]                                     # (F_PAD, TILE_B) f32, lane-dense
    for layer in range(3):                             # unrolled at trace time
        h = jnp.dot(w_ref[layer], h, preferred_element_type=jnp.float32) + b_ref[layer]
        h = jnp.maximum(h, 0.0)                        # VPU, full-vreg ReLU
    h = jnp.dot(w_ref[3], h, preferred_element_type=jnp.float32) + b_ref[3]
    o_ref[...] = h[:2, :].astype(o_ref.dtype)          # lane-dense (2, TILE_B) store


def _round_up(n, m):
    return pl.cdiv(n, m) * m


def classifier_forward(x, params):
    """x: (B, 2) float32. params: {'w': (4,16,16), 'b': (4,16,1)}. Returns (B, 2)."""
    B, f_in = x.shape
    w, b = params["w"], params["b"]

    tile_b = min(MAX_TILE_B, _round_up(B, 128))
    b_pad = _round_up(B, tile_b)

    # Batch on lanes, features zero-padded to F_PAD sublanes.
    xt = jnp.zeros((F_PAD, b_pad), jnp.float32).at[:f_in, :B].set(x.T)

    out = pl.pallas_call(
        mlp_kernel,
        out_shape=jax.ShapeDtypeStruct((2, b_pad), jnp.float32),
        grid=(b_pad // tile_b,),
        in_specs=[
            pl.BlockSpec((F_PAD, tile_b), lambda i: (0, i)),        # activations: tiled over batch
            pl.BlockSpec((4, F_PAD, F_PAD), lambda i: (0, 0, 0)),   # weights: VMEM-resident
            pl.BlockSpec((4, F_PAD, 1), lambda i: (0, 0, 0)),       # biases: VMEM-resident
        ],
        out_specs=pl.BlockSpec((2, tile_b), lambda i: (0, i)),
        compiler_params=pltpu.CompilerParams(
            dimension_semantics=("parallel",)),                      # megacore-shardable batch axis
    )(xt, w, b)

    return out[:, :B].T                                              # back to (B, 2)


def init_params(key):
    """Mirror nn.Linear init: weight (out, in), bias (out,), both U(-1/sqrt(in), 1/sqrt(in)).
    Returns (packed params for the kernel, raw per-layer params for the reference)."""
    dims = [(2, 10), (10, 10), (10, 10), (10, 2)]     # (fan_in, fan_out)
    w_packed = jnp.zeros((4, F_PAD, F_PAD), jnp.float32)
    b_packed = jnp.zeros((4, F_PAD, 1), jnp.float32)
    raw = {}
    for idx, (fan_in, fan_out) in enumerate(dims):
        key, kw, kb = jax.random.split(key, 3)
        bound = 1.0 / (fan_in ** 0.5)
        wi = jax.random.uniform(kw, (fan_out, fan_in), jnp.float32,
                                minval=-bound, maxval=bound)
        bi = jax.random.uniform(kb, (fan_out,), jnp.float32,
                                minval=-bound, maxval=bound)
        w_packed = w_packed.at[idx, :fan_out, :fan_in].set(wi)
        b_packed = b_packed.at[idx, :fan_out, 0].set(bi)
        raw[f"w{idx + 1}"] = wi
        raw[f"b{idx + 1}"] = bi
    return {"w": w_packed, "b": b_packed}, raw


def reference_forward(x, raw):
    h = jnp.maximum(x @ raw["w1"].T + raw["b1"], 0.0)
    h = jnp.maximum(h @ raw["w2"].T + raw["b2"], 0.0)
    h = jnp.maximum(h @ raw["w3"].T + raw["b3"], 0.0)
    return h @ raw["w4"].T + raw["b4"]


if __name__ == "__main__":
    key = jax.random.PRNGKey(0)
    key, kx = jax.random.split(key)
    params, raw = init_params(key)

    # Small-shape check (single grid step).
    batch = 8
    x = jax.random.normal(kx, (batch, 2), jnp.float32)
    out = jax.block_until_ready(classifier_forward(x, params))
    ref = reference_forward(x, raw)
    assert out.shape == (batch, 2)
    assert jnp.allclose(out, ref, atol=1e-5, rtol=1e-5)

    # Multi-tile / ragged-batch check (exercises the batch grid + padding path).
    key, kx2 = jax.random.split(key)
    batch2 = 1029
    x2 = jax.random.normal(kx2, (batch2, 2), jnp.float32)
    out2 = jax.block_until_ready(classifier_forward(x2, params))
    ref2 = reference_forward(x2, raw)
    assert out2.shape == (batch2, 2)
    assert jnp.allclose(out2, ref2, atol=1e-5, rtol=1e-5)

    print("KERNEL_OK")
</pallas_src>

<mosaic_0001>
module attributes {stable_mosaic.version = 11 : i64} {
  func.func @mlp_kernel(%arg0: i32, %arg1: memref<16x128xf32, #tpu.memory_space<vmem>>, %arg2: memref<4x16x16xf32, #tpu.memory_space<vmem>>, %arg3: memref<4x16x1xf32, #tpu.memory_space<vmem>>, %arg4: memref<2x128xf32, #tpu.memory_space<vmem>>) attributes {dimension_semantics = [#tpu.dimension_semantics<parallel>], iteration_bounds = array<i64: 1>, scalar_prefetch = 0 : i64, scratch_operands = 0 : i64, tpu.core_type = #tpu.core_type<tc>, window_params = [{transform_indices = @transform_0, window_bounds = array<i64: 16, 128>}, {pipeline_mode = #tpu.pipeline_mode<synchronous>, transform_indices = @transform_1, window_bounds = array<i64: 4, 16, 16>}, {pipeline_mode = #tpu.pipeline_mode<synchronous>, transform_indices = @transform_2, window_bounds = array<i64: 4, 16, 1>}, {transform_indices = @transform_3, window_bounds = array<i64: 2, 128>}]} {
    %c0 = arith.constant 0 : index
    %c0_0 = arith.constant 0 : index
    %0 = vector.load %arg1[%c0, %c0_0] : memref<16x128xf32, #tpu.memory_space<vmem>>, vector<16x128xf32>
    %c0_1 = arith.constant 0 : index
    %c0_2 = arith.constant 0 : index
    %c0_3 = arith.constant 0 : index
    %1 = vector.load %arg2[%c0_1, %c0_2, %c0_3] : memref<4x16x16xf32, #tpu.memory_space<vmem>>, vector<1x16x16xf32>
    %2 = vector.shape_cast %1 : vector<1x16x16xf32> to vector<16x16xf32>
    %cst = arith.constant dense<0.000000e+00> : vector<16x128xf32>
    %3 = tpu.matmul %2, %0, %cst {dimension_numbers = #tpu.dot_dimension_numbers<[1], [0], [0], [1], [0, 0, 1, 1], [], []>} : vector<16x16xf32>, vector<16x128xf32>, vector<16x128xf32> -> vector<16x128xf32>
    %c0_4 = arith.constant 0 : index
    %c0_5 = arith.constant 0 : index
    %c0_6 = arith.constant 0 : index
    %4 = vector.load %arg3[%c0_4, %c0_5, %c0_6] : memref<4x16x1xf32, #tpu.memory_space<vmem>>, vector<1x16x1xf32>
    %5 = vector.shape_cast %4 : vector<1x16x1xf32> to vector<16x1xf32>
    %6 = vector.broadcast %5 : vector<16x1xf32> to vector<16x128xf32>
    %7 = arith.addf %3, %6 : vector<16x128xf32>
    %cst_7 = arith.constant 0.000000e+00 : f32
    %8 = vector.broadcast %cst_7 : f32 to vector<16x128xf32>
    %9 = arith.maximumf %7, %8 : vector<16x128xf32>
    %c1 = arith.constant 1 : index
    %c0_8 = arith.constant 0 : index
    %c0_9 = arith.constant 0 : index
    %10 = vector.load %arg2[%c1, %c0_8, %c0_9] : memref<4x16x16xf32, #tpu.memory_space<vmem>>, vector<1x16x16xf32>
    %11 = vector.shape_cast %10 : vector<1x16x16xf32> to vector<16x16xf32>
    %cst_10 = arith.constant dense<0.000000e+00> : vector<16x128xf32>
    %12 = tpu.matmul %11, %9, %cst_10 {dimension_numbers = #tpu.dot_dimension_numbers<[1], [0], [0], [1], [0, 0, 1, 1], [], []>} : vector<16x16xf32>, vector<16x128xf32>, vector<16x128xf32> -> vector<16x128xf32>
    %c1_11 = arith.constant 1 : index
    %c0_12 = arith.constant 0 : index
    %c0_13 = arith.constant 0 : index
    %13 = vector.load %arg3[%c1_11, %c0_12, %c0_13] : memref<4x16x1xf32, #tpu.memory_space<vmem>>, vector<1x16x1xf32>
    %14 = vector.shape_cast %13 : vector<1x16x1xf32> to vector<16x1xf32>
    %15 = vector.broadcast %14 : vector<16x1xf32> to vector<16x128xf32>
    %16 = arith.addf %12, %15 : vector<16x128xf32>
    %cst_14 = arith.constant 0.000000e+00 : f32
    %17 = vector.broadcast %cst_14 : f32 to vector<16x128xf32>
    %18 = arith.maximumf %16, %17 : vector<16x128xf32>
    %c2 = arith.constant 2 : index
    %c0_15 = arith.constant 0 : index
    %c0_16 = arith.constant 0 : index
    %19 = vector.load %arg2[%c2, %c0_15, %c0_16] : memref<4x16x16xf32, #tpu.memory_space<vmem>>, vector<1x16x16xf32>
    %20 = vector.shape_cast %19 : vector<1x16x16xf32> to vector<16x16xf32>
    %cst_17 = arith.constant dense<0.000000e+00> : vector<16x128xf32>
    %21 = tpu.matmul %20, %18, %cst_17 {dimension_numbers = #tpu.dot_dimension_numbers<[1], [0], [0], [1], [0, 0, 1, 1], [], []>} : vector<16x16xf32>, vector<16x128xf32>, vector<16x128xf32> -> vector<16x128xf32>
    %c2_18 = arith.constant 2 : index
    %c0_19 = arith.constant 0 : index
    %c0_20 = arith.constant 0 : index
    %22 = vector.load %arg3[%c2_18, %c0_19, %c0_20] : memref<4x16x1xf32, #tpu.memory_space<vmem>>, vector<1x16x1xf32>
    %23 = vector.shape_cast %22 : vector<1x16x1xf32> to vector<16x1xf32>
    %24 = vector.broadcast %23 : vector<16x1xf32> to vector<16x128xf32>
    %25 = arith.addf %21, %24 : vector<16x128xf32>
    %cst_21 = arith.constant 0.000000e+00 : f32
    %26 = vector.broadcast %cst_21 : f32 to vector<16x128xf32>
    %27 = arith.maximumf %25, %26 : vector<16x128xf32>
    %c3 = arith.constant 3 : index
    %c0_22 = arith.constant 0 : index
    %c0_23 = arith.constant 0 : index
    %28 = vector.load %arg2[%c3, %c0_22, %c0_23] : memref<4x16x16xf32, #tpu.memory_space<vmem>>, vector<1x16x16xf32>
    %29 = vector.shape_cast %28 : vector<1x16x16xf32> to vector<16x16xf32>
    %cst_24 = arith.constant dense<0.000000e+00> : vector<16x128xf32>
    %30 = tpu.matmul %29, %27, %cst_24 {dimension_numbers = #tpu.dot_dimension_numbers<[1], [0], [0], [1], [0, 0, 1, 1], [], []>} : vector<16x16xf32>, vector<16x128xf32>, vector<16x128xf32> -> vector<16x128xf32>
    %c3_25 = arith.constant 3 : index
    %c0_26 = arith.constant 0 : index
    %c0_27 = arith.constant 0 : index
    %31 = vector.load %arg3[%c3_25, %c0_26, %c0_27] : memref<4x16x1xf32, #tpu.memory_space<vmem>>, vector<1x16x1xf32>
    %32 = vector.shape_cast %31 : vector<1x16x1xf32> to vector<16x1xf32>
    %33 = vector.broadcast %32 : vector<16x1xf32> to vector<16x128xf32>
    %34 = arith.addf %30, %33 : vector<16x128xf32>
    %35 = vector.extract_strided_slice %34 {offsets = [0, 0], sizes = [2, 128], strides = [1, 1]} : vector<16x128xf32> to vector<2x128xf32>
    %c0_28 = arith.constant 0 : index
    %c0_29 = arith.constant 0 : index
    %36 = vector.load %arg4[%c0_28, %c0_29] : memref<2x128xf32, #tpu.memory_space<vmem>>, vector<2x128xf32>
    tpu.vector_store %arg4[%c0_28, %c0_29], %35 {strides = array<i32>} : memref<2x128xf32, #tpu.memory_space<vmem>>, vector<2x128xf32>,
    return
  }
  func.func @transform_0(%arg0: i32) -> (i32, i32) {
    %c0_i32 = arith.constant 0 : i32
    %c0_i32_0 = arith.constant 0 : i32
    return %c0_i32, %arg0 : i32, i32
  }
  func.func @transform_1(%arg0: i32) -> (i32, i32, i32) {
    %c0_i32 = arith.constant 0 : i32
    %c0_i32_0 = arith.constant 0 : i32
    %c0_i32_1 = arith.constant 0 : i32
    %c0_i32_2 = arith.constant 0 : i32
    return %c0_i32, %c0_i32_0, %c0_i32_1 : i32, i32, i32
  }
  func.func @transform_2(%arg0: i32) -> (i32, i32, i32) {
    %c0_i32 = arith.constant 0 : i32
    %c0_i32_0 = arith.constant 0 : i32
    %c0_i32_1 = arith.constant 0 : i32
    %c0_i32_2 = arith.constant 0 : i32
    return %c0_i32, %c0_i32_0, %c0_i32_1 : i32, i32, i32
  }
  func.func @transform_3(%arg0: i32) -> (i32, i32) {
    %c0_i32 = arith.constant 0 : i32
    %c0_i32_0 = arith.constant 0 : i32
    return %c0_i32, %arg0 : i32, i32
  }
}

</mosaic_0001>

<llo_original>
// kernel: tpu_custom_call.1
$region0: #{tpu_custom_call.1}
  #allocation0 [shape = 'u32[]', space=smem, size = 0x4, offset = 0x4, fixed_abs, tag = 'smem constant byte address 0x4 - core index']
  #allocation1 [shape = 'u32[144,128]{1,0:T(1,128)}', space=vmem, size = 0x12000, scoped, tag = 'internal scratch']
  %s0 = inlined_call_operand.hbm [shape: f32[16,128], index: 0, kind: input, shape index: {}]
  %s1 = inlined_call_operand.vmem [shape: f32[4,16,16], index: 1, kind: input, shape index: {}]
  %s2 = inlined_call_operand.vmem [shape: f32[4,16,1], index: 2, kind: input, shape index: {}]
  %s3 = inlined_call_operand.hbm [shape: f32[2,128], index: 3, kind: output, shape index: {}]
  %s4 = sld [smem:[#allocation0]]
  $region26: #{tpu_custom_call.1} parent=0
    _
  %s6 = ssub.s32 1, %s4
  %s7 = scalar_select 0, %s6, %s4
  $region1: #{tpu_custom_call.1} parent=0
    #allocation2 [shape = 'u8[8192]{0}', space=vmem, size = 0x2000, scoped, tag = 'input window, operand 0, single buffered']
    #allocation3 [shape = 's32[1]{0}', space=sflag, size = 0x4, scoped, tag = 'scoped memory for tpu_custom_call.1']
    #allocation4 [shape = 's32[1]{0}', space=sflag, size = 0x4, scoped, tag = 'scoped memory for tpu_custom_call.1']
    #allocation5 [shape = 'u8[1024]{0}', space=vmem, size = 0x400, scoped, tag = 'output window, operand 0, single buffered']
    %8 = vsyncpa [#allocation3], 0
    %9 = vsyncpa [#allocation4], 0
    // Predicated region
    $region2: #{tpu_custom_call.1} parent=1 // pred_check
      _
    $region3: #{tpu_custom_call.1} parent=1 // pred_check_branch
      %11 = sbr.rel (0) target = $region5
    $region4: #{tpu_custom_call.1} parent=1 // pred_region
      %s13 = ssub.s32 256, 256
      %14 = vsyncadd [#allocation3], %s13
      %s15 = sshll.u32 [#allocation2], 4
      %s16 = int_to_ptr.vmem [resolvable:$true] %s15
      %21 = dma.hbm_to_vmem [thread:$0]  %s0, 256, %s16, [#allocation3], 128, 128, 8
    $region5: #{tpu_custom_call.1} parent=1 // pred_fallthru
      _
    // Predicated region
    $region6: #{tpu_custom_call.1} parent=1 // pred_check
      _
    $region7: #{tpu_custom_call.1} parent=1 // pred_check_branch
      %23 = sbr.rel (0) target = $region9
    $region8: #{tpu_custom_call.1} parent=1 // pred_region
      _
    $region9: #{tpu_custom_call.1} parent=1 // pred_fallthru
      _
    // Predicated region
    $region10: #{tpu_custom_call.1} parent=1 // pred_check
      _
    $region11: #{tpu_custom_call.1} parent=1 // pred_check_branch
      %25 = sbr.rel (0) target = $region13
    $region12: #{tpu_custom_call.1} parent=1 // pred_region
      _
    $region13: #{tpu_custom_call.1} parent=1 // pred_fallthru
      _
    // Predicated region
    $region14: #{tpu_custom_call.1} parent=1 // pred_check
      _
    $region15: #{tpu_custom_call.1} parent=1 // pred_check_branch
      %27 = sbr.rel (0) target = $region17
    $region16: #{tpu_custom_call.1} parent=1 // pred_region
      %28 = dma.done [#allocation3], 256
    $region17: #{tpu_custom_call.1} parent=1 // pred_fallthru
      _
    %v29 = vld [vmem:[#allocation2] sm:$0xff]
    %v30 = vld [vmem:[#allocation2 + $0x8] sm:$0xff]
    %v31 = vld [vmem:[%s1] sm:$0xff]
    %v32 = vld [vmem:[%s1 + $0x8] sm:$0xff]
    %v33 = vld [vmem:[%s2] sm:$0xff]
    %v34 = vld [vmem:[%s2 + $0x8] sm:$0xff]
    %36 = vset.pattern.permute.xlu0 0
    %37 = vperm.xlu0 %36, %v33
    %v38 = vpop.permute.xlu0 %37
    %41 = vset.pattern.permute.xlu0 0
    %42 = vperm.xlu0 %41, %v34
    %v43 = vpop.permute.xlu0 %42
    %vm45 = vcmask 130048
    %v47 = vsel %vm45, %v31, 0
    %v50 = vsel %vm45, %v32, 0
    %52 = vmatprep.subr.mxu0 0.0
    %53 = vmatpush1.msra.mxu0 0.0
    %54 = vmatprep.subr.mxu0 0.0
    %55 = vmatpush1.msra.mxu0 0.0
    %56 = vmatprep.subr.mxu0 0.0
    %57 = vmatpush1.msra.mxu0 0.0
    %58 = vmatprep.subr.mxu0 0.0
    %59 = vmatpush1.msra.mxu0 0.0
    %60 = vmatprep.subr.mxu0 0.0
    %61 = vmatpush1.msra.mxu0 0.0
    %62 = vmatprep.subr.mxu0 0.0
    %63 = vmatpush1.msra.mxu0 0.0
    %64 = vmatprep.subr.mxu0 0.0
    %65 = vmatpush1.msra.mxu0 0.0
    %66 = vmatprep.subr.mxu0 0.0
    %67 = vmatpush1.msra.mxu0 0.0
    %68 = vmatprep.subr.mxu0 0.0
    %69 = vmatpush1.msra.mxu0 0.0
    %70 = vmatprep.subr.mxu0 0.0
    %71 = vmatpush1.msra.mxu0 0.0
    %72 = vmatprep.subr.mxu0 0.0
    %73 = vmatpush1.msra.mxu0 0.0
    %74 = vmatprep.subr.mxu0 0.0
    %75 = vmatpush1.msra.mxu0 0.0
    %76 = vmatprep.subr.mxu0 0.0
    %77 = vmatpush1.msra.mxu0 0.0
    %78 = vmatprep.subr.mxu0 0.0
    %79 = vmatpush1.msra.mxu0 0.0
    %80 = vmatprep.subr.mxu0 0.0
    %81 = vmatpush1.msra.mxu0 %v30
    %82 = vmatprep.subr.mxu0 0.0
    %83 = vmatpush1.msra.mxu0 %v29
    %84 = vmatprep.subr.mxu0 0.0
    %85 = vmatpush2.msra.mxu0 0.0
    %86 = vmatprep.subr.mxu0 0.0
    %87 = vmatpush2.msra.mxu0 0.0
    %88 = vmatprep.subr.mxu0 0.0
    %89 = vmatpush2.msra.mxu0 0.0
    %90 = vmatprep.subr.mxu0 0.0
    %91 = vmatpush2.msra.mxu0 0.0
    %92 = vmatprep.subr.mxu0 0.0
    %93 = vmatpush2.msra.mxu0 0.0
    %94 = vmatprep.subr.mxu0 0.0
    %95 = vmatpush2.msra.mxu0 0.0
    %96 = vmatprep.subr.mxu0 0.0
    %97 = vmatpush2.msra.mxu0 0.0
    %98 = vmatprep.subr.mxu0 0.0
    %99 = vmatpush2.msra.mxu0 0.0
    %100 = vmatprep.subr.mxu0 0.0
    %101 = vmatpush2.msra.mxu0 0.0
    %102 = vmatprep.subr.mxu0 0.0
    %103 = vmatpush2.msra.mxu0 0.0
    %104 = vmatprep.subr.mxu0 0.0
    %105 = vmatpush2.msra.mxu0 0.0
    %106 = vmatprep.subr.mxu0 0.0
    %107 = vmatpush2.msra.mxu0 0.0
    %108 = vmatprep.subr.mxu0 0.0
    %109 = vmatpush2.msra.mxu0 0.0
    %110 = vmatprep.subr.mxu0 0.0
    %111 = vmatpush2.msra.mxu0 0.0
    %112 = vmatprep.subr.mxu0 0.0
    %113 = vmatpush2.msra.mxu0 0.0
    %114 = vmatprep.subr.mxu0 0.0
    %115 = vmatpush2.msra.mxu0 0.0
    %116 = vmatprep.mubr.f32.mxu0 0.0
    %117 = vmatmul.mubr.f32.gmra.mxu0 %v47
    %v118 = vpop.f32.mrf.mxu0
    %v119 = vadd.f32 %v38, %v118
    %v120 = vpop.f32.mrf.mxu0
    %121 = vmatprep.mubr.f32.mxu0 0.0
    %122 = vmatmul.mubr.f32.gmra.mxu0 %v50
    %v123 = vpop.f32.mrf.mxu0
    %v124 = vadd.f32 %v43, %v123
    %v125 = vpop.f32.mrf.mxu0
    %126 = vdwg.mxu0
    %v127 = vmax.f32 %v119, 0.0
    %v128 = vmax.f32 %v124, 0.0
    %s129 = scalar_lea.vmem %s1, 16
    %v130 = vld [vmem:[%s129] sm:$0xff]
    %v131 = vld [vmem:[%s129 + $0x8] sm:$0xff]
    %s132 = scalar_lea.vmem %s2, 16
    %v133 = vld [vmem:[%s132] sm:$0xff]
    %v134 = vld [vmem:[%s132 + $0x8] sm:$0xff]
    %136 = vset.pattern.permute.xlu0 0
    %137 = vperm.xlu0 %136, %v133
    %v138 = vpop.permute.xlu0 %137
    %141 = vset.pattern.permute.xlu0 0
    %142 = vperm.xlu0 %141, %v134
    %v143 = vpop.permute.xlu0 %142
    %v146 = vsel %vm45, %v130, 0
    %v149 = vsel %vm45, %v131, 0
    %151 = vmatprep.subr.mxu0 0.0
    %152 = vmatpush1.msra.mxu0 0.0
    %153 = vmatprep.subr.mxu0 0.0
    %154 = vmatpush1.msra.mxu0 0.0
    %155 = vmatprep.subr.mxu0 0.0
    %156 = vmatpush1.msra.mxu0 0.0
    %157 = vmatprep.subr.mxu0 0.0
    %158 = vmatpush1.msra.mxu0 0.0
    %159 = vmatprep.subr.mxu0 0.0
    %160 = vmatpush1.msra.mxu0 0.0
    %161 = vmatprep.subr.mxu0 0.0
    %162 = vmatpush1.msra.mxu0 0.0
    %163 = vmatprep.subr.mxu0 0.0
    %164 = vmatpush1.msra.mxu0 0.0
    %165 = vmatprep.subr.mxu0 0.0
    %166 = vmatpush1.msra.mxu0 0.0
    %167 = vmatprep.subr.mxu0 0.0
    %168 = vmatpush1.msra.mxu0 0.0
    %169 = vmatprep.subr.mxu0 0.0
    %170 = vmatpush1.msra.mxu0 0.0
    %171 = vmatprep.subr.mxu0 0.0
    %172 = vmatpush1.msra.mxu0 0.0
    %173 = vmatprep.subr.mxu0 0.0
    %174 = vmatpush1.msra.mxu0 0.0
    %175 = vmatprep.subr.mxu0 0.0
    %176 = vmatpush1.msra.mxu0 0.0
    %177 = vmatprep.subr.mxu0 0.0
    %178 = vmatpush1.msra.mxu0 0.0
    %179 = vmatprep.subr.mxu0 0.0
    %180 = vmatpush1.msra.mxu0 %v128
    %181 = vmatprep.subr.mxu0 0.0
    %182 = vmatpush1.msra.mxu0 %v127
    %183 = vmatprep.subr.mxu0 0.0
    %184 = vmatpush2.msra.mxu0 0.0
    %185 = vmatprep.subr.mxu0 0.0
    %186 = vmatpush2.msra.mxu0 0.0
    %187 = vmatprep.subr.mxu0 0.0
    %188 = vmatpush2.msra.mxu0 0.0
    %189 = vmatprep.subr.mxu0 0.0
    %190 = vmatpush2.msra.mxu0 0.0
    %191 = vmatprep.subr.mxu0 0.0
    %192 = vmatpush2.msra.mxu0 0.0
    %193 = vmatprep.subr.mxu0 0.0
    %194 = vmatpush2.msra.mxu0 0.0
    %195 = vmatprep.subr.mxu0 0.0
    %196 = vmatpush2.msra.mxu0 0.0
    %197 = vmatprep.subr.mxu0 0.0
    %198 = vmatpush2.msra.mxu0 0.0
    %199 = vmatprep.subr.mxu0 0.0
    %200 = vmatpush2.msra.mxu0 0.0
    %201 = vmatprep.subr.mxu0 0.0
    %202 = vmatpush2.msra.mxu0 0.0
    %203 = vmatprep.subr.mxu0 0.0
    %204 = vmatpush2.msra.mxu0 0.0
    %205 = vmatprep.subr.mxu0 0.0
    %206 = vmatpush2.msra.mxu0 0.0
    %207 = vmatprep.subr.mxu0 0.0
    %208 = vmatpush2.msra.mxu0 0.0
    %209 = vmatprep.subr.mxu0 0.0
    %210 = vmatpush2.msra.mxu0 0.0
    %211 = vmatprep.subr.mxu0 0.0
    %212 = vmatpush2.msra.mxu0 0.0
    %213 = vmatprep.subr.mxu0 0.0
    %214 = vmatpush2.msra.mxu0 0.0
    %215 = vmatprep.mubr.f32.mxu0 0.0
    %216 = vmatmul.mubr.f32.gmra.mxu0 %v146
    %v217 = vpop.f32.mrf.mxu0
    %v218 = vadd.f32 %v138, %v217
    %v219 = vpop.f32.mrf.mxu0
    %220 = vmatprep.mubr.f32.mxu0 0.0
    %221 = vmatmul.mubr.f32.gmra.mxu0 %v149
    %v222 = vpop.f32.mrf.mxu0
    %v223 = vadd.f32 %v143, %v222
    %v224 = vpop.f32.mrf.mxu0
    %225 = vdwg.mxu0
    %v226 = vmax.f32 %v218, 0.0
    %v227 = vmax.f32 %v223, 0.0
    %s228 = scalar_lea.vmem %s1, 32
    %v229 = vld [vmem:[%s228] sm:$0xff]
    %v230 = vld [vmem:[%s228 + $0x8] sm:$0xff]
    %s231 = scalar_lea.vmem %s2, 32
    %v232 = vld [vmem:[%s231] sm:$0xff]
    %v233 = vld [vmem:[%s231 + $0x8] sm:$0xff]
    %235 = vset.pattern.permute.xlu0 0
    %236 = vperm.xlu0 %235, %v232
    %v237 = vpop.permute.xlu0 %236
    %240 = vset.pattern.permute.xlu0 0
    %241 = vperm.xlu0 %240, %v233
    %v242 = vpop.permute.xlu0 %241
    %v245 = vsel %vm45, %v229, 0
    %v248 = vsel %vm45, %v230, 0
    %250 = vmatprep.subr.mxu0 0.0
    %251 = vmatpush1.msra.mxu0 0.0
    %252 = vmatprep.subr.mxu0 0.0
    %253 = vmatpush1.msra.mxu0 0.0
    %254 = vmatprep.subr.mxu0 0.0
    %255 = vmatpush1.msra.mxu0 0.0
    %256 = vmatprep.subr.mxu0 0.0
    %257 = vmatpush1.msra.mxu0 0.0
    %258 = vmatprep.subr.mxu0 0.0
    %259 = vmatpush1.msra.mxu0 0.0
    %260 = vmatprep.subr.mxu0 0.0
    %261 = vmatpush1.msra.mxu0 0.0
    %262 = vmatprep.subr.mxu0 0.0
    %263 = vmatpush1.msra.mxu0 0.0
    %264 = vmatprep.subr.mxu0 0.0
    %265 = vmatpush1.msra.mxu0 0.0
    %266 = vmatprep.subr.mxu0 0.0
    %267 = vmatpush1.msra.mxu0 0.0
    %268 = vmatprep.subr.mxu0 0.0
    %269 = vmatpush1.msra.mxu0 0.0
    %270 = vmatprep.subr.mxu0 0.0
    %271 = vmatpush1.msra.mxu0 0.0
    %272 = vmatprep.subr.mxu0 0.0
    %273 = vmatpush1.msra.mxu0 0.0
    %274 = vmatprep.subr.mxu0 0.0
    %275 = vmatpush1.msra.mxu0 0.0
    %276 = vmatprep.subr.mxu0 0.0
    %277 = vmatpush1.msra.mxu0 0.0
    %278 = vmatprep.subr.mxu0 0.0
    %279 = vmatpush1.msra.mxu0 %v227
    %280 = vmatprep.subr.mxu0 0.0
    %281 = vmatpush1.msra.mxu0 %v226
    %282 = vmatprep.subr.mxu0 0.0
    %283 = vmatpush2.msra.mxu0 0.0
    %284 = vmatprep.subr.mxu0 0.0
    %285 = vmatpush2.msra.mxu0 0.0
    %286 = vmatprep.subr.mxu0 0.0
    %287 = vmatpush2.msra.mxu0 0.0
    %288 = vmatprep.subr.mxu0 0.0
    %289 = vmatpush2.msra.mxu0 0.0
    %290 = vmatprep.subr.mxu0 0.0
    %291 = vmatpush2.msra.mxu0 0.0
    %292 = vmatprep.subr.mxu0 0.0
    %293 = vmatpush2.msra.mxu0 0.0
    %294 = vmatprep.subr.mxu0 0.0
    %295 = vmatpush2.msra.mxu0 0.0
    %296 = vmatprep.subr.mxu0 0.0
    %297 = vmatpush2.msra.mxu0 0.0
    %298 = vmatprep.subr.mxu0 0.0
    %299 = vmatpush2.msra.mxu0 0.0
    %300 = vmatprep.subr.mxu0 0.0
    %301 = vmatpush2.msra.mxu0 0.0
    %302 = vmatprep.subr.mxu0 0.0
    %303 = vmatpush2.msra.mxu0 0.0
    %304 = vmatprep.subr.mxu0 0.0
    %305 = vmatpush2.msra.mxu0 0.0
    %306 = vmatprep.subr.mxu0 0.0
    %307 = vmatpush2.msra.mxu0 0.0
    %308 = vmatprep.subr.mxu0 0.0
    %309 = vmatpush2.msra.mxu0 0.0
    %310 = vmatprep.subr.mxu0 0.0
    %311 = vmatpush2.msra.mxu0 0.0
    %312 = vmatprep.subr.mxu0 0.0
    %313 = vmatpush2.msra.mxu0 0.0
    %314 = vmatprep.mubr.f32.mxu0 0.0
    %315 = vmatmul.mubr.f32.gmra.mxu0 %v245
    %v316 = vpop.f32.mrf.mxu0
    %v317 = vadd.f32 %v237, %v316
    %v318 = vpop.f32.mrf.mxu0
    %319 = vmatprep.mubr.f32.mxu0 0.0
    %320 = vmatmul.mubr.f32.gmra.mxu0 %v248
    %v321 = vpop.f32.mrf.mxu0
    %v322 = vadd.f32 %v242, %v321
    %v323 = vpop.f32.mrf.mxu0
    %324 = vdwg.mxu0
    %v325 = vmax.f32 %v317, 0.0
    %v326 = vmax.f32 %v322, 0.0
    %s327 = scalar_lea.vmem %s1, 48
    %v328 = vld [vmem:[%s327] sm:$0xff]
    %v329 = vld [vmem:[%s327 + $0x8] sm:$0xff]
    %s330 = scalar_lea.vmem %s2, 48
    %v331 = vld [vmem:[%s330] sm:$0xff]
    %v332 = vld [vmem:[%s330 + $0x8] sm:$0xff]
    %334 = vset.pattern.permute.xlu0 0
    %335 = vperm.xlu0 %334, %v331
    %v336 = vpop.permute.xlu0 %335
    %339 = vset.pattern.permute.xlu0 0
    %340 = vperm.xlu0 %339, %v332
    %v341 = vpop.permute.xlu0 %340
    %v343 = vsel %vm45, %v328, 0
    %v346 = vsel %vm45, %v329, 0
    %348 = vmatprep.subr.mxu0 0.0
    %349 = vmatpush1.msra.mxu0 0.0
    %350 = vmatprep.subr.mxu0 0.0
    %351 = vmatpush1.msra.mxu0 0.0
    %352 = vmatprep.subr.mxu0 0.0
    %353 = vmatpush1.msra.mxu0 0.0
    %354 = vmatprep.subr.mxu0 0.0
    %355 = vmatpush1.msra.mxu0 0.0
    %356 = vmatprep.subr.mxu0 0.0
    %357 = vmatpush1.msra.mxu0 0.0
    %358 = vmatprep.subr.mxu0 0.0
    %359 = vmatpush1.msra.mxu0 0.0
    %360 = vmatprep.subr.mxu0 0.0
    %361 = vmatpush1.msra.mxu0 0.0
    %362 = vmatprep.subr.mxu0 0.0
    %363 = vmatpush1.msra.mxu0 0.0
    %364 = vmatprep.subr.mxu0 0.0
    %365 = vmatpush1.msra.mxu0 0.0
    %366 = vmatprep.subr.mxu0 0.0
    %367 = vmatpush1.msra.mxu0 0.0
    %368 = vmatprep.subr.mxu0 0.0
    %369 = vmatpush1.msra.mxu0 0.0
    %370 = vmatprep.subr.mxu0 0.0
    %371 = vmatpush1.msra.mxu0 0.0
    %372 = vmatprep.subr.mxu0 0.0
    %373 = vmatpush1.msra.mxu0 0.0
    %374 = vmatprep.subr.mxu0 0.0
    %375 = vmatpush1.msra.mxu0 0.0
    %376 = vmatprep.subr.mxu0 0.0
    %377 = vmatpush1.msra.mxu0 %v326
    %378 = vmatprep.subr.mxu0 0.0
    %379 = vmatpush1.msra.mxu0 %v325
    %380 = vmatprep.subr.mxu0 0.0
    %381 = vmatpush2.msra.mxu0 0.0
    %382 = vmatprep.subr.mxu0 0.0
    %383 = vmatpush2.msra.mxu0 0.0
    %384 = vmatprep.subr.mxu0 0.0
    %385 = vmatpush2.msra.mxu0 0.0
    %386 = vmatprep.subr.mxu0 0.0
    %387 = vmatpush2.msra.mxu0 0.0
    %388 = vmatprep.subr.mxu0 0.0
    %389 = vmatpush2.msra.mxu0 0.0
    %390 = vmatprep.subr.mxu0 0.0
    %391 = vmatpush2.msra.mxu0 0.0
    %392 = vmatprep.subr.mxu0 0.0
    %393 = vmatpush2.msra.mxu0 0.0
    %394 = vmatprep.subr.mxu0 0.0
    %395 = vmatpush2.msra.mxu0 0.0
    %396 = vmatprep.subr.mxu0 0.0
    %397 = vmatpush2.msra.mxu0 0.0
    %398 = vmatprep.subr.mxu0 0.0
    %399 = vmatpush2.msra.mxu0 0.0
    %400 = vmatprep.subr.mxu0 0.0
    %401 = vmatpush2.msra.mxu0 0.0
    %402 = vmatprep.subr.mxu0 0.0
    %403 = vmatpush2.msra.mxu0 0.0
    %404 = vmatprep.subr.mxu0 0.0
    %405 = vmatpush2.msra.mxu0 0.0
    %406 = vmatprep.subr.mxu0 0.0
    %407 = vmatpush2.msra.mxu0 0.0
    %408 = vmatprep.subr.mxu0 0.0
    %409 = vmatpush2.msra.mxu0 0.0
    %410 = vmatprep.subr.mxu0 0.0
    %411 = vmatpush2.msra.mxu0 0.0
    %412 = vmatprep.mubr.f32.mxu0 0.0
    %413 = vmatmul.mubr.f32.gmra.mxu0 %v343
    %v414 = vpop.f32.mrf.mxu0
    %v415 = vadd.f32 %v336, %v414
    %v416 = vpop.f32.mrf.mxu0
    %417 = vmatprep.mubr.f32.mxu0 0.0
    %418 = vmatmul.mubr.f32.gmra.mxu0 %v346
    %v419 = vpop.f32.mrf.mxu0
    %v420 = vpop.f32.mrf.mxu0
    %421 = vdwg.mxu0
    %422 = vst [vmem:[#allocation5] sm:$0x3] %v415
    // Predicated region
    $region18: #{tpu_custom_call.1} parent=1 // pred_check
      _
    $region19: #{tpu_custom_call.1} parent=1 // pred_check_branch
      %424 = sbr.rel (0) target = $region21
    $region20: #{tpu_custom_call.1} parent=1 // pred_region
      %s426 = ssub.s32 32, 32
      %427 = vsyncadd [#allocation4], %s426
      %s429 = sshll.u32 [#allocation5], 4
      %s430 = int_to_ptr.vmem [resolvable:$true] %s429
      %432 = dma.vmem_to_hbm [thread:$0]  %s430, 32, %s3, [#allocation4]
    $region21: #{tpu_custom_call.1} parent=1 // pred_fallthru
      _
    // Predicated region
    $region22: #{tpu_custom_call.1} parent=1 // pred_check
      _
    $region23: #{tpu_custom_call.1} parent=1 // pred_check_branch
      %434 = sbr.rel (0) target = $region25
    $region24: #{tpu_custom_call.1} parent=1 // pred_region
      %435 = dma.done [#allocation4], 32
    $region25: #{tpu_custom_call.1} parent=1 // pred_fallthru
      _
    %436 = vsyncpa [#allocation3], 1
    %437 = vsyncpa [#allocation4], 1

</llo_original>
